<compile_context>
chip_gen: v7x
topology: tpu7x:2x2x1
jax: 0.10.0
libtpu: 0.0.40
codegen_flags: <defaults>
</compile_context>

<pallas_src>
import functools

import jax
import jax.numpy as jnp
from jax import lax
from jax.experimental import pallas as pl
from jax.experimental.pallas import tpu as pltpu


def _dilconv_kernel(w_ref, a_ref, b_ref, o_ref, *, H, W, KH, KW, dil):
    """One batch tile of the dilated (2 -> 1 channel) convolution.

    w_ref : SMEM (2*KH*KW,) f32   conv weight flattened as [c, kh, kw]
    a_ref : VMEM (Hp, Wp, TB)     zero-padded channel-0 plane (native dtype)
    b_ref : VMEM (Hp, Wp, TB)     zero-padded channel-1 plane (native dtype)
    o_ref : VMEM (H,  W,  TB)     output tile (native dtype)

    Batch (TB) is the lane axis, so every load/store below is lane-dense.
    The 9 taps are unrolled static slices of the pre-padded planes; the
    accumulator lives in registers and o_ref is written exactly once.
    """
    acc = None
    for kh in range(KH):
        r0 = kh * dil
        for kw in range(KW):
            c0 = kw * dil
            wa = w_ref[kh * KW + kw]              # channel-0 tap weight
            wb = w_ref[KH * KW + kh * KW + kw]    # channel-1 tap weight
            tap = (wa * a_ref[r0:r0 + H, c0:c0 + W, :].astype(jnp.float32)
                   + wb * b_ref[r0:r0 + H, c0:c0 + W, :].astype(jnp.float32))
            acc = tap if acc is None else acc + tap
    o_ref[...] = acc.astype(o_ref.dtype)


def _pick_batch_tile(B, per_elem_bytes, *, budget_bytes=24 * 1024 * 1024, cap=512):
    """Largest lane-dense batch tile (multiple of 128) that divides B and fits
    the VMEM budget; prefers >=2 grid steps (v7x megacore).  Falls back to the
    full batch (legal: block dim == full array dim) for small/awkward B."""
    cap = min(cap, max(128, (budget_bytes // max(per_elem_bytes, 1)) // 128 * 128))
    cands = [t for t in range(128, min(B, cap) + 1, 128) if B % t == 0]
    if not cands:
        return B
    multi = [t for t in cands if B // t >= 2]
    return max(multi) if multi else max(cands)


def dil_conv2d(x0, x1, x2, rel, weight, *, n, emb_s, kernel_size,
               padding=2, dilation=2):
    """Pallas implementation of DilConv2d.forward.

    Args:
      x0, x1, x2: [B, 1, emb_s] arrays.
      rel: unused (kept for signature parity with the PyTorch module).
      weight: conv weight [1, 2, kernel_size, kernel_size] (no bias).
      n: which pair to use (0 -> (x1,x2), 1 -> (x0,x2), else -> (x0,x1)).
    Returns:
      [B, 1, emb_s] array (same dtype as the inputs).
    """
    del rel  # unused in the PyTorch forward

    # Channel selection, mirroring torch.cat([...], dim=1).
    if n == 0:
        a, b = x1, x2
    elif n == 1:
        a, b = x0, x2
    else:
        a, b = x0, x1

    B = a.shape[0]
    W = 10
    H = emb_s // 10
    assert H * W == emb_s, "emb_s must be divisible by 10"
    KH = KW = kernel_size
    H_out = H + 2 * padding - dilation * (KH - 1)
    W_out = W + 2 * padding - dilation * (KW - 1)
    assert (H_out, W_out) == (H, W), (
        "module's final .view(-1, 1, emb_s) requires a size-preserving conv "
        "(kernel_size=3, padding=2, dilation=2)")

    out_dtype = a.dtype
    itemsize = jnp.dtype(out_dtype).itemsize
    Hp, Wp = H + 2 * padding, W + 2 * padding

    # One fused XLA pass per input plane: [B,1,emb_s] -> zero-padded,
    # batch-on-lanes (Hp, Wp, B).  This is the lane-dense layout plumbing.
    def to_padded_hwb(x):
        x = x.reshape(B, H, W)
        x = jnp.pad(x, ((0, 0), (padding, padding), (padding, padding)))
        return jnp.transpose(x, (1, 2, 0))

    a_p = to_padded_hwb(a)
    b_p = to_padded_hwb(b)
    w_flat = weight.reshape(-1).astype(jnp.float32)   # (2*KH*KW,)

    # Batch tile: lane-dense layout makes per-element VMEM cost tiny
    # (inputs x2 buffers + output x2 buffers + f32 register/temp working set).
    per_elem = (2 * 2 * Hp * Wp + 2 * H * W) * itemsize + 6 * H * W * 4
    TB = _pick_batch_tile(B, per_elem)
    grid = (B // TB,)

    # VMEM limit = actual pipelined footprint + headroom, never the full
    # physical VMEM (64 MiB on v7x).
    io_bytes = (2 * 2 * Hp * Wp + 2 * H * W) * TB * itemsize
    vmem_limit = int(min(48 * 1024 * 1024,
                         max(16 * 1024 * 1024, 2 * io_bytes + (2 << 20))))

    kernel = functools.partial(_dilconv_kernel, H=H, W=W, KH=KH, KW=KW,
                               dil=dilation)

    out_hwb = pl.pallas_call(
        kernel,
        out_shape=jax.ShapeDtypeStruct((H, W, B), out_dtype),
        grid=grid,
        in_specs=[
            pl.BlockSpec(memory_space=pltpu.MemorySpace.SMEM),     # weights
            pl.BlockSpec((Hp, Wp, TB), lambda i: (0, 0, i)),       # channel 0
            pl.BlockSpec((Hp, Wp, TB), lambda i: (0, 0, i)),       # channel 1
        ],
        out_specs=pl.BlockSpec((H, W, TB), lambda i: (0, 0, i)),
        compiler_params=pltpu.CompilerParams(
            dimension_semantics=("parallel",),   # batch tiles are independent
            vmem_limit_bytes=vmem_limit,
        ),
        cost_estimate=pl.CostEstimate(
            flops=4 * KH * KW * B * emb_s,
            transcendentals=0,
            bytes_accessed=(2 * Hp * Wp + H * W) * B * itemsize,
        ),
    )(w_flat, a_p, b_p)

    # (H, W, B) -> [B, 1, emb_s]
    return out_hwb.transpose(2, 0, 1).reshape(B, 1, emb_s)


if __name__ == "__main__":
    # Small shapes consistent with the module: emb_s divisible by 10.
    B, emb_s, n, ksize, padding, dilation = 8, 40, 2, 3, 2, 2
    key = jax.random.PRNGKey(0)
    k0, k1, k2, kr, kw = jax.random.split(key, 5)

    x0 = jax.random.normal(k0, (B, 1, emb_s), dtype=jnp.float32)
    x1 = jax.random.normal(k1, (B, 1, emb_s), dtype=jnp.float32)
    x2 = jax.random.normal(k2, (B, 1, emb_s), dtype=jnp.float32)
    rel = jax.random.normal(kr, (B, 1, emb_s), dtype=jnp.float32)  # unused
    weight = 0.1 * jax.random.normal(kw, (1, 2, ksize, ksize), dtype=jnp.float32)

    out = dil_conv2d(x0, x1, x2, rel, weight, n=n, emb_s=emb_s,
                     kernel_size=ksize, padding=padding, dilation=dilation)
    jax.block_until_ready(out)

    # Pure-JAX reference (mirrors the PyTorch forward).
    if n == 0:
        xc = jnp.concatenate([x1, x2], axis=1)
    elif n == 1:
        xc = jnp.concatenate([x0, x2], axis=1)
    else:
        xc = jnp.concatenate([x0, x1], axis=1)
    x4 = xc.reshape(B, 2, emb_s // 10, 10)
    ref = lax.conv_general_dilated(
        x4, weight, window_strides=(1, 1),
        padding=((padding, padding), (padding, padding)),
        rhs_dilation=(dilation, dilation),
        dimension_numbers=("NCHW", "OIHW", "NCHW"),
        precision=lax.Precision.HIGHEST,
    ).reshape(B, 1, emb_s)

    assert out.shape == (B, 1, emb_s)
    assert jnp.allclose(out, ref, atol=1e-4, rtol=1e-4)
    print("KERNEL_OK")
</pallas_src>

<mosaic_0001>
module attributes {stable_mosaic.version = 11 : i64} {
  func.func @_dilconv_kernel(%arg0: i32, %arg1: memref<18xf32, #tpu.memory_space<smem>>, %arg2: memref<8x14x8xf32, #tpu.memory_space<vmem>>, %arg3: memref<8x14x8xf32, #tpu.memory_space<vmem>>, %arg4: memref<4x10x8xf32, #tpu.memory_space<vmem>>) attributes {dimension_semantics = [#tpu.dimension_semantics<parallel>], iteration_bounds = array<i64: 1>, scalar_prefetch = 0 : i64, scratch_operands = 0 : i64, tpu.core_type = #tpu.core_type<tc>, window_params = [{transform_indices = @transform_0, window_bounds = array<i64: 18>}, {transform_indices = @transform_1, window_bounds = array<i64: 8, 14, 8>}, {transform_indices = @transform_2, window_bounds = array<i64: 8, 14, 8>}, {transform_indices = @transform_3, window_bounds = array<i64: 4, 10, 8>}]} {
    %c0 = arith.constant 0 : index
    %0 = memref.load %arg1[%c0] : memref<18xf32, #tpu.memory_space<smem>>
    %c9 = arith.constant 9 : index
    %1 = memref.load %arg1[%c9] : memref<18xf32, #tpu.memory_space<smem>>
    %c0_0 = arith.constant 0 : index
    %c0_1 = arith.constant 0 : index
    %c0_2 = arith.constant 0 : index
    %2 = vector.load %arg2[%c0_0, %c0_1, %c0_2] : memref<8x14x8xf32, #tpu.memory_space<vmem>>, vector<4x10x8xf32>
    %3 = vector.broadcast %0 : f32 to vector<4x10x8xf32>
    %4 = arith.mulf %3, %2 : vector<4x10x8xf32>
    %c0_3 = arith.constant 0 : index
    %c0_4 = arith.constant 0 : index
    %c0_5 = arith.constant 0 : index
    %5 = vector.load %arg3[%c0_3, %c0_4, %c0_5] : memref<8x14x8xf32, #tpu.memory_space<vmem>>, vector<4x10x8xf32>
    %6 = vector.broadcast %1 : f32 to vector<4x10x8xf32>
    %7 = arith.mulf %6, %5 : vector<4x10x8xf32>
    %8 = arith.addf %4, %7 : vector<4x10x8xf32>
    %c1 = arith.constant 1 : index
    %9 = memref.load %arg1[%c1] : memref<18xf32, #tpu.memory_space<smem>>
    %c10 = arith.constant 10 : index
    %10 = memref.load %arg1[%c10] : memref<18xf32, #tpu.memory_space<smem>>
    %c0_6 = arith.constant 0 : index
    %c2 = arith.constant 2 : index
    %c0_7 = arith.constant 0 : index
    %11 = vector.load %arg2[%c0_6, %c2, %c0_7] : memref<8x14x8xf32, #tpu.memory_space<vmem>>, vector<4x10x8xf32>
    %12 = vector.broadcast %9 : f32 to vector<4x10x8xf32>
    %13 = arith.mulf %12, %11 : vector<4x10x8xf32>
    %c0_8 = arith.constant 0 : index
    %c2_9 = arith.constant 2 : index
    %c0_10 = arith.constant 0 : index
    %14 = vector.load %arg3[%c0_8, %c2_9, %c0_10] : memref<8x14x8xf32, #tpu.memory_space<vmem>>, vector<4x10x8xf32>
    %15 = vector.broadcast %10 : f32 to vector<4x10x8xf32>
    %16 = arith.mulf %15, %14 : vector<4x10x8xf32>
    %17 = arith.addf %13, %16 : vector<4x10x8xf32>
    %18 = arith.addf %8, %17 : vector<4x10x8xf32>
    %c2_11 = arith.constant 2 : index
    %19 = memref.load %arg1[%c2_11] : memref<18xf32, #tpu.memory_space<smem>>
    %c11 = arith.constant 11 : index
    %20 = memref.load %arg1[%c11] : memref<18xf32, #tpu.memory_space<smem>>
    %c0_12 = arith.constant 0 : index
    %c4 = arith.constant 4 : index
    %c0_13 = arith.constant 0 : index
    %21 = vector.load %arg2[%c0_12, %c4, %c0_13] : memref<8x14x8xf32, #tpu.memory_space<vmem>>, vector<4x10x8xf32>
    %22 = vector.broadcast %19 : f32 to vector<4x10x8xf32>
    %23 = arith.mulf %22, %21 : vector<4x10x8xf32>
    %c0_14 = arith.constant 0 : index
    %c4_15 = arith.constant 4 : index
    %c0_16 = arith.constant 0 : index
    %24 = vector.load %arg3[%c0_14, %c4_15, %c0_16] : memref<8x14x8xf32, #tpu.memory_space<vmem>>, vector<4x10x8xf32>
    %25 = vector.broadcast %20 : f32 to vector<4x10x8xf32>
    %26 = arith.mulf %25, %24 : vector<4x10x8xf32>
    %27 = arith.addf %23, %26 : vector<4x10x8xf32>
    %28 = arith.addf %18, %27 : vector<4x10x8xf32>
    %c3 = arith.constant 3 : index
    %29 = memref.load %arg1[%c3] : memref<18xf32, #tpu.memory_space<smem>>
    %c12 = arith.constant 12 : index
    %30 = memref.load %arg1[%c12] : memref<18xf32, #tpu.memory_space<smem>>
    %c2_17 = arith.constant 2 : index
    %c0_18 = arith.constant 0 : index
    %c0_19 = arith.constant 0 : index
    %31 = vector.load %arg2[%c2_17, %c0_18, %c0_19] : memref<8x14x8xf32, #tpu.memory_space<vmem>>, vector<4x10x8xf32>
    %32 = vector.broadcast %29 : f32 to vector<4x10x8xf32>
    %33 = arith.mulf %32, %31 : vector<4x10x8xf32>
    %c2_20 = arith.constant 2 : index
    %c0_21 = arith.constant 0 : index
    %c0_22 = arith.constant 0 : index
    %34 = vector.load %arg3[%c2_20, %c0_21, %c0_22] : memref<8x14x8xf32, #tpu.memory_space<vmem>>, vector<4x10x8xf32>
    %35 = vector.broadcast %30 : f32 to vector<4x10x8xf32>
    %36 = arith.mulf %35, %34 : vector<4x10x8xf32>
    %37 = arith.addf %33, %36 : vector<4x10x8xf32>
    %38 = arith.addf %28, %37 : vector<4x10x8xf32>
    %c4_23 = arith.constant 4 : index
    %39 = memref.load %arg1[%c4_23] : memref<18xf32, #tpu.memory_space<smem>>
    %c13 = arith.constant 13 : index
    %40 = memref.load %arg1[%c13] : memref<18xf32, #tpu.memory_space<smem>>
    %c2_24 = arith.constant 2 : index
    %c2_25 = arith.constant 2 : index
    %c0_26 = arith.constant 0 : index
    %41 = vector.load %arg2[%c2_24, %c2_25, %c0_26] : memref<8x14x8xf32, #tpu.memory_space<vmem>>, vector<4x10x8xf32>
    %42 = vector.broadcast %39 : f32 to vector<4x10x8xf32>
    %43 = arith.mulf %42, %41 : vector<4x10x8xf32>
    %c2_27 = arith.constant 2 : index
    %c2_28 = arith.constant 2 : index
    %c0_29 = arith.constant 0 : index
    %44 = vector.load %arg3[%c2_27, %c2_28, %c0_29] : memref<8x14x8xf32, #tpu.memory_space<vmem>>, vector<4x10x8xf32>
    %45 = vector.broadcast %40 : f32 to vector<4x10x8xf32>
    %46 = arith.mulf %45, %44 : vector<4x10x8xf32>
    %47 = arith.addf %43, %46 : vector<4x10x8xf32>
    %48 = arith.addf %38, %47 : vector<4x10x8xf32>
    %c5 = arith.constant 5 : index
    %49 = memref.load %arg1[%c5] : memref<18xf32, #tpu.memory_space<smem>>
    %c14 = arith.constant 14 : index
    %50 = memref.load %arg1[%c14] : memref<18xf32, #tpu.memory_space<smem>>
    %c2_30 = arith.constant 2 : index
    %c4_31 = arith.constant 4 : index
    %c0_32 = arith.constant 0 : index
    %51 = vector.load %arg2[%c2_30, %c4_31, %c0_32] : memref<8x14x8xf32, #tpu.memory_space<vmem>>, vector<4x10x8xf32>
    %52 = vector.broadcast %49 : f32 to vector<4x10x8xf32>
    %53 = arith.mulf %52, %51 : vector<4x10x8xf32>
    %c2_33 = arith.constant 2 : index
    %c4_34 = arith.constant 4 : index
    %c0_35 = arith.constant 0 : index
    %54 = vector.load %arg3[%c2_33, %c4_34, %c0_35] : memref<8x14x8xf32, #tpu.memory_space<vmem>>, vector<4x10x8xf32>
    %55 = vector.broadcast %50 : f32 to vector<4x10x8xf32>
    %56 = arith.mulf %55, %54 : vector<4x10x8xf32>
    %57 = arith.addf %53, %56 : vector<4x10x8xf32>
    %58 = arith.addf %48, %57 : vector<4x10x8xf32>
    %c6 = arith.constant 6 : index
    %59 = memref.load %arg1[%c6] : memref<18xf32, #tpu.memory_space<smem>>
    %c15 = arith.constant 15 : index
    %60 = memref.load %arg1[%c15] : memref<18xf32, #tpu.memory_space<smem>>
    %c4_36 = arith.constant 4 : index
    %c0_37 = arith.constant 0 : index
    %c0_38 = arith.constant 0 : index
    %61 = vector.load %arg2[%c4_36, %c0_37, %c0_38] : memref<8x14x8xf32, #tpu.memory_space<vmem>>, vector<4x10x8xf32>
    %62 = vector.broadcast %59 : f32 to vector<4x10x8xf32>
    %63 = arith.mulf %62, %61 : vector<4x10x8xf32>
    %c4_39 = arith.constant 4 : index
    %c0_40 = arith.constant 0 : index
    %c0_41 = arith.constant 0 : index
    %64 = vector.load %arg3[%c4_39, %c0_40, %c0_41] : memref<8x14x8xf32, #tpu.memory_space<vmem>>, vector<4x10x8xf32>
    %65 = vector.broadcast %60 : f32 to vector<4x10x8xf32>
    %66 = arith.mulf %65, %64 : vector<4x10x8xf32>
    %67 = arith.addf %63, %66 : vector<4x10x8xf32>
    %68 = arith.addf %58, %67 : vector<4x10x8xf32>
    %c7 = arith.constant 7 : index
    %69 = memref.load %arg1[%c7] : memref<18xf32, #tpu.memory_space<smem>>
    %c16 = arith.constant 16 : index
    %70 = memref.load %arg1[%c16] : memref<18xf32, #tpu.memory_space<smem>>
    %c4_42 = arith.constant 4 : index
    %c2_43 = arith.constant 2 : index
    %c0_44 = arith.constant 0 : index
    %71 = vector.load %arg2[%c4_42, %c2_43, %c0_44] : memref<8x14x8xf32, #tpu.memory_space<vmem>>, vector<4x10x8xf32>
    %72 = vector.broadcast %69 : f32 to vector<4x10x8xf32>
    %73 = arith.mulf %72, %71 : vector<4x10x8xf32>
    %c4_45 = arith.constant 4 : index
    %c2_46 = arith.constant 2 : index
    %c0_47 = arith.constant 0 : index
    %74 = vector.load %arg3[%c4_45, %c2_46, %c0_47] : memref<8x14x8xf32, #tpu.memory_space<vmem>>, vector<4x10x8xf32>
    %75 = vector.broadcast %70 : f32 to vector<4x10x8xf32>
    %76 = arith.mulf %75, %74 : vector<4x10x8xf32>
    %77 = arith.addf %73, %76 : vector<4x10x8xf32>
    %78 = arith.addf %68, %77 : vector<4x10x8xf32>
    %c8 = arith.constant 8 : index
    %79 = memref.load %arg1[%c8] : memref<18xf32, #tpu.memory_space<smem>>
    %c17 = arith.constant 17 : index
    %80 = memref.load %arg1[%c17] : memref<18xf32, #tpu.memory_space<smem>>
    %c4_48 = arith.constant 4 : index
    %c4_49 = arith.constant 4 : index
    %c0_50 = arith.constant 0 : index
    %81 = vector.load %arg2[%c4_48, %c4_49, %c0_50] : memref<8x14x8xf32, #tpu.memory_space<vmem>>, vector<4x10x8xf32>
    %82 = vector.broadcast %79 : f32 to vector<4x10x8xf32>
    %83 = arith.mulf %82, %81 : vector<4x10x8xf32>
    %c4_51 = arith.constant 4 : index
    %c4_52 = arith.constant 4 : index
    %c0_53 = arith.constant 0 : index
    %84 = vector.load %arg3[%c4_51, %c4_52, %c0_53] : memref<8x14x8xf32, #tpu.memory_space<vmem>>, vector<4x10x8xf32>
    %85 = vector.broadcast %80 : f32 to vector<4x10x8xf32>
    %86 = arith.mulf %85, %84 : vector<4x10x8xf32>
    %87 = arith.addf %83, %86 : vector<4x10x8xf32>
    %88 = arith.addf %78, %87 : vector<4x10x8xf32>
    %c0_54 = arith.constant 0 : index
    %c0_55 = arith.constant 0 : index
    %c0_56 = arith.constant 0 : index
    %89 = vector.load %arg4[%c0_54, %c0_55, %c0_56] : memref<4x10x8xf32, #tpu.memory_space<vmem>>, vector<4x10x8xf32>
    tpu.vector_store %arg4[%c0_54, %c0_55, %c0_56], %88 {strides = array<i32>} : memref<4x10x8xf32, #tpu.memory_space<vmem>>, vector<4x10x8xf32>,
    return
  }
  func.func @transform_0(%arg0: i32) -> i32 {
    %c0_i32 = arith.constant 0 : i32
    %c0_i32_0 = arith.constant 0 : i32
    return %c0_i32 : i32
  }
  func.func @transform_1(%arg0: i32) -> (i32, i32, i32) {
    %c0_i32 = arith.constant 0 : i32
    %c0_i32_0 = arith.constant 0 : i32
    %c0_i32_1 = arith.constant 0 : i32
    return %c0_i32, %c0_i32_0, %arg0 : i32, i32, i32
  }
  func.func @transform_2(%arg0: i32) -> (i32, i32, i32) {
    %c0_i32 = arith.constant 0 : i32
    %c0_i32_0 = arith.constant 0 : i32
    %c0_i32_1 = arith.constant 0 : i32
    return %c0_i32, %c0_i32_0, %arg0 : i32, i32, i32
  }
  func.func @transform_3(%arg0: i32) -> (i32, i32, i32) {
    %c0_i32 = arith.constant 0 : i32
    %c0_i32_0 = arith.constant 0 : i32
    %c0_i32_1 = arith.constant 0 : i32
    return %c0_i32, %c0_i32_0, %arg0 : i32, i32, i32
  }
}

</mosaic_0001>

<llo_original>
// kernel: tpu_custom_call.1
$region0: #{tpu_custom_call.1}
  #allocation0 [shape = 'u32[]', space=smem, size = 0x4, offset = 0x4, fixed_abs, tag = 'smem constant byte address 0x4 - core index']
  #allocation1 [shape = 'u32[144,128]{1,0:T(1,128)}', space=vmem, size = 0x12000, scoped, tag = 'internal scratch']
  %s0 = inlined_call_operand.vmem [shape: f32[18], index: 0, kind: input, shape index: {}]
  %s1 = inlined_call_operand.vmem [shape: f32[8,14,8], index: 1, kind: input, shape index: {}]
  %s2 = inlined_call_operand.vmem [shape: f32[8,14,8], index: 2, kind: input, shape index: {}]
  %s3 = inlined_call_operand.vmem [shape: f32[4,10,8], index: 3, kind: output, shape index: {}]
  %s4 = sld [smem:[#allocation0]]
  $region26: #{tpu_custom_call.1} parent=0
    _
  %s6 = ssub.s32 1, %s4
  %s7 = scalar_select 0, %s6, %s4
  $region1: #{tpu_custom_call.1} parent=0
    #allocation2 [shape = 'u8[512]{0}', space=smem, size = 0x200, scoped, tag = 'input window, operand 0, single buffered']
    #allocation3 [shape = 's32[1]{0}', space=sflag, size = 0x4, scoped, tag = 'scoped memory for tpu_custom_call.1']
    %8 = vsyncpa [#allocation3], 0
    // Predicated region
    $region2: #{tpu_custom_call.1} parent=1 // pred_check
      _
    $region3: #{tpu_custom_call.1} parent=1 // pred_check_branch
      %10 = sbr.rel (0) target = $region5
    $region4: #{tpu_custom_call.1} parent=1 // pred_region
      %s12 = ssub.s32 16, 16
      %13 = vsyncadd [#allocation3], %s12
      %s15 = sshll.u32 %s0, 4
      %s16 = int_to_ptr.vmem [resolvable:$true] %s15
      %18 = dma.vmem_to_smem %s16, 16, [#allocation2], [#allocation3]
    $region5: #{tpu_custom_call.1} parent=1 // pred_fallthru
      _
    // Predicated region
    $region6: #{tpu_custom_call.1} parent=1 // pred_check
      _
    $region7: #{tpu_custom_call.1} parent=1 // pred_check_branch
      %20 = sbr.rel (0) target = $region9
    $region8: #{tpu_custom_call.1} parent=1 // pred_region
      _
    $region9: #{tpu_custom_call.1} parent=1 // pred_fallthru
      _
    // Predicated region
    $region10: #{tpu_custom_call.1} parent=1 // pred_check
      _
    $region11: #{tpu_custom_call.1} parent=1 // pred_check_branch
      %22 = sbr.rel (0) target = $region13
    $region12: #{tpu_custom_call.1} parent=1 // pred_region
      _
    $region13: #{tpu_custom_call.1} parent=1 // pred_fallthru
      _
    // Predicated region
    $region14: #{tpu_custom_call.1} parent=1 // pred_check
      _
    $region15: #{tpu_custom_call.1} parent=1 // pred_check_branch
      %24 = sbr.rel (0) target = $region17
    $region16: #{tpu_custom_call.1} parent=1 // pred_region
      %25 = dma.done [#allocation3], 16
    $region17: #{tpu_custom_call.1} parent=1 // pred_fallthru
      _
    %26 = sfence
    %s27 = sld [smem:[#allocation2]]
    %s28 = sld [smem:[#allocation2 + $0x9]]
    %v29 = vld [vmem:[%s1] sm:$0xff]
    %v30 = vld [vmem:[%s1 + $0x8] sm:$0x3]
    %v31 = vld [vmem:[%s1 + $0x10] sm:$0xff]
    %v32 = vld [vmem:[%s1 + $0x18] sm:$0x3]
    %v33 = vld [vmem:[%s1 + $0x20] sm:$0xff]
    %v34 = vld [vmem:[%s1 + $0x28] sm:$0x3]
    %v35 = vld [vmem:[%s1 + $0x30] sm:$0xff]
    %v36 = vld [vmem:[%s1 + $0x38] sm:$0x3]
    %v37 = vstv %s27
    %v38 = vmul.f32 %v37, %v29
    %v39 = vmul.f32 %v37, %v30
    %v40 = vmul.f32 %v37, %v31
    %v41 = vmul.f32 %v37, %v32
    %v42 = vmul.f32 %v37, %v33
    %v43 = vmul.f32 %v37, %v34
    %v44 = vmul.f32 %v37, %v35
    %v45 = vmul.f32 %v37, %v36
    %v46 = vld [vmem:[%s2] sm:$0xff]
    %v47 = vld [vmem:[%s2 + $0x8] sm:$0x3]
    %v48 = vld [vmem:[%s2 + $0x10] sm:$0xff]
    %v49 = vld [vmem:[%s2 + $0x18] sm:$0x3]
    %v50 = vld [vmem:[%s2 + $0x20] sm:$0xff]
    %v51 = vld [vmem:[%s2 + $0x28] sm:$0x3]
    %v52 = vld [vmem:[%s2 + $0x30] sm:$0xff]
    %v53 = vld [vmem:[%s2 + $0x38] sm:$0x3]
    %v54 = vstv %s28
    %v55 = vmul.f32 %v54, %v46
    %v56 = vmul.f32 %v54, %v47
    %v57 = vmul.f32 %v54, %v48
    %v58 = vmul.f32 %v54, %v49
    %v59 = vmul.f32 %v54, %v50
    %v60 = vmul.f32 %v54, %v51
    %v61 = vmul.f32 %v54, %v52
    %v62 = vmul.f32 %v54, %v53
    %v63 = vadd.f32 %v38, %v55
    %v64 = vadd.f32 %v39, %v56
    %v65 = vadd.f32 %v40, %v57
    %v66 = vadd.f32 %v41, %v58
    %v67 = vadd.f32 %v42, %v59
    %v68 = vadd.f32 %v43, %v60
    %v69 = vadd.f32 %v44, %v61
    %v70 = vadd.f32 %v45, %v62
    %s71 = sld [smem:[#allocation2 + $0x1]]
    %s72 = sld [smem:[#allocation2 + $0xa]]
    %v73 = vld [vmem:[%s1 + $0x2] sm:$0xff]
    %v74 = vld [vmem:[%s1 + $0xa] sm:$0x3]
    %v75 = vld [vmem:[%s1 + $0x12] sm:$0xff]
    %v76 = vld [vmem:[%s1 + $0x1a] sm:$0x3]
    %v77 = vld [vmem:[%s1 + $0x22] sm:$0xff]
    %v78 = vld [vmem:[%s1 + $0x2a] sm:$0x3]
    %v79 = vld [vmem:[%s1 + $0x32] sm:$0xff]
    %v80 = vld [vmem:[%s1 + $0x3a] sm:$0x3]
    %v81 = vstv %s71
    %v82 = vmul.f32 %v81, %v73
    %v83 = vmul.f32 %v81, %v74
    %v84 = vmul.f32 %v81, %v75
    %v85 = vmul.f32 %v81, %v76
    %v86 = vmul.f32 %v81, %v77
    %v87 = vmul.f32 %v81, %v78
    %v88 = vmul.f32 %v81, %v79
    %v89 = vmul.f32 %v81, %v80
    %v90 = vld [vmem:[%s2 + $0x2] sm:$0xff]
    %v91 = vld [vmem:[%s2 + $0xa] sm:$0x3]
    %v92 = vld [vmem:[%s2 + $0x12] sm:$0xff]
    %v93 = vld [vmem:[%s2 + $0x1a] sm:$0x3]
    %v94 = vld [vmem:[%s2 + $0x22] sm:$0xff]
    %v95 = vld [vmem:[%s2 + $0x2a] sm:$0x3]
    %v96 = vld [vmem:[%s2 + $0x32] sm:$0xff]
    %v97 = vld [vmem:[%s2 + $0x3a] sm:$0x3]
    %v98 = vstv %s72
    %v99 = vmul.f32 %v98, %v90
    %v100 = vmul.f32 %v98, %v91
    %v101 = vmul.f32 %v98, %v92
    %v102 = vmul.f32 %v98, %v93
    %v103 = vmul.f32 %v98, %v94
    %v104 = vmul.f32 %v98, %v95
    %v105 = vmul.f32 %v98, %v96
    %v106 = vmul.f32 %v98, %v97
    %v107 = vadd.f32 %v82, %v99
    %v108 = vadd.f32 %v83, %v100
    %v109 = vadd.f32 %v84, %v101
    %v110 = vadd.f32 %v85, %v102
    %v111 = vadd.f32 %v86, %v103
    %v112 = vadd.f32 %v87, %v104
    %v113 = vadd.f32 %v88, %v105
    %v114 = vadd.f32 %v89, %v106
    %v115 = vadd.f32 %v63, %v107
    %v116 = vadd.f32 %v64, %v108
    %v117 = vadd.f32 %v65, %v109
    %v118 = vadd.f32 %v66, %v110
    %v119 = vadd.f32 %v67, %v111
    %v120 = vadd.f32 %v68, %v112
    %v121 = vadd.f32 %v69, %v113
    %v122 = vadd.f32 %v70, %v114
    %s123 = sld [smem:[#allocation2 + $0x2]]
    %s124 = sld [smem:[#allocation2 + $0xb]]
    %v125 = vld [vmem:[%s1 + $0x4] sm:$0xff]
    %v126 = vld [vmem:[%s1 + $0xc] sm:$0x3]
    %v127 = vld [vmem:[%s1 + $0x14] sm:$0xff]
    %v128 = vld [vmem:[%s1 + $0x1c] sm:$0x3]
    %v129 = vld [vmem:[%s1 + $0x24] sm:$0xff]
    %v130 = vld [vmem:[%s1 + $0x2c] sm:$0x3]
    %v131 = vld [vmem:[%s1 + $0x34] sm:$0xff]
    %v132 = vld [vmem:[%s1 + $0x3c] sm:$0x3]
    %v133 = vstv %s123
    %v134 = vmul.f32 %v133, %v125
    %v135 = vmul.f32 %v133, %v126
    %v136 = vmul.f32 %v133, %v127
    %v137 = vmul.f32 %v133, %v128
    %v138 = vmul.f32 %v133, %v129
    %v139 = vmul.f32 %v133, %v130
    %v140 = vmul.f32 %v133, %v131
    %v141 = vmul.f32 %v133, %v132
    %v142 = vld [vmem:[%s2 + $0x4] sm:$0xff]
    %v143 = vld [vmem:[%s2 + $0xc] sm:$0x3]
    %v144 = vld [vmem:[%s2 + $0x14] sm:$0xff]
    %v145 = vld [vmem:[%s2 + $0x1c] sm:$0x3]
    %v146 = vld [vmem:[%s2 + $0x24] sm:$0xff]
    %v147 = vld [vmem:[%s2 + $0x2c] sm:$0x3]
    %v148 = vld [vmem:[%s2 + $0x34] sm:$0xff]
    %v149 = vld [vmem:[%s2 + $0x3c] sm:$0x3]
    %v150 = vstv %s124
    %v151 = vmul.f32 %v150, %v142
    %v152 = vmul.f32 %v150, %v143
    %v153 = vmul.f32 %v150, %v144
    %v154 = vmul.f32 %v150, %v145
    %v155 = vmul.f32 %v150, %v146
    %v156 = vmul.f32 %v150, %v147
    %v157 = vmul.f32 %v150, %v148
    %v158 = vmul.f32 %v150, %v149
    %v159 = vadd.f32 %v134, %v151
    %v160 = vadd.f32 %v135, %v152
    %v161 = vadd.f32 %v136, %v153
    %v162 = vadd.f32 %v137, %v154
    %v163 = vadd.f32 %v138, %v155
    %v164 = vadd.f32 %v139, %v156
    %v165 = vadd.f32 %v140, %v157
    %v166 = vadd.f32 %v141, %v158
    %v167 = vadd.f32 %v115, %v159
    %v168 = vadd.f32 %v116, %v160
    %v169 = vadd.f32 %v117, %v161
    %v170 = vadd.f32 %v118, %v162
    %v171 = vadd.f32 %v119, %v163
    %v172 = vadd.f32 %v120, %v164
    %v173 = vadd.f32 %v121, %v165
    %v174 = vadd.f32 %v122, %v166
    %s175 = sld [smem:[#allocation2 + $0x3]]
    %s176 = sld [smem:[#allocation2 + $0xc]]
    %s177 = scalar_lea.vmem %s1, 32
    %v178 = vld [vmem:[%s177] sm:$0xff]
    %v179 = vld [vmem:[%s177 + $0x8] sm:$0x3]
    %v180 = vld [vmem:[%s177 + $0x10] sm:$0xff]
    %v181 = vld [vmem:[%s177 + $0x18] sm:$0x3]
    %v182 = vld [vmem:[%s177 + $0x20] sm:$0xff]
    %v183 = vld [vmem:[%s177 + $0x28] sm:$0x3]
    %v184 = vld [vmem:[%s177 + $0x30] sm:$0xff]
    %v185 = vld [vmem:[%s177 + $0x38] sm:$0x3]
    %v186 = vstv %s175
    %v187 = vmul.f32 %v186, %v178
    %v188 = vmul.f32 %v186, %v179
    %v189 = vmul.f32 %v186, %v180
    %v190 = vmul.f32 %v186, %v181
    %v191 = vmul.f32 %v186, %v182
    %v192 = vmul.f32 %v186, %v183
    %v193 = vmul.f32 %v186, %v184
    %v194 = vmul.f32 %v186, %v185
    %s195 = scalar_lea.vmem %s2, 32
    %v196 = vld [vmem:[%s195] sm:$0xff]
    %v197 = vld [vmem:[%s195 + $0x8] sm:$0x3]
    %v198 = vld [vmem:[%s195 + $0x10] sm:$0xff]
    %v199 = vld [vmem:[%s195 + $0x18] sm:$0x3]
    %v200 = vld [vmem:[%s195 + $0x20] sm:$0xff]
    %v201 = vld [vmem:[%s195 + $0x28] sm:$0x3]
    %v202 = vld [vmem:[%s195 + $0x30] sm:$0xff]
    %v203 = vld [vmem:[%s195 + $0x38] sm:$0x3]
    %v204 = vstv %s176
    %v205 = vmul.f32 %v204, %v196
    %v206 = vmul.f32 %v204, %v197
    %v207 = vmul.f32 %v204, %v198
    %v208 = vmul.f32 %v204, %v199
    %v209 = vmul.f32 %v204, %v200
    %v210 = vmul.f32 %v204, %v201
    %v211 = vmul.f32 %v204, %v202
    %v212 = vmul.f32 %v204, %v203
    %v213 = vadd.f32 %v187, %v205
    %v214 = vadd.f32 %v188, %v206
    %v215 = vadd.f32 %v189, %v207
    %v216 = vadd.f32 %v190, %v208
    %v217 = vadd.f32 %v191, %v209
    %v218 = vadd.f32 %v192, %v210
    %v219 = vadd.f32 %v193, %v211
    %v220 = vadd.f32 %v194, %v212
    %v221 = vadd.f32 %v167, %v213
    %v222 = vadd.f32 %v168, %v214
    %v223 = vadd.f32 %v169, %v215
    %v224 = vadd.f32 %v170, %v216
    %v225 = vadd.f32 %v171, %v217
    %v226 = vadd.f32 %v172, %v218
    %v227 = vadd.f32 %v173, %v219
    %v228 = vadd.f32 %v174, %v220
    %s229 = sld [smem:[#allocation2 + $0x4]]
    %s230 = sld [smem:[#allocation2 + $0xd]]
    %v231 = vld [vmem:[%s177 + $0x2] sm:$0xff]
    %v232 = vld [vmem:[%s177 + $0xa] sm:$0x3]
    %v233 = vld [vmem:[%s177 + $0x12] sm:$0xff]
    %v234 = vld [vmem:[%s177 + $0x1a] sm:$0x3]
    %v235 = vld [vmem:[%s177 + $0x22] sm:$0xff]
    %v236 = vld [vmem:[%s177 + $0x2a] sm:$0x3]
    %v237 = vld [vmem:[%s177 + $0x32] sm:$0xff]
    %v238 = vld [vmem:[%s177 + $0x3a] sm:$0x3]
    %v239 = vstv %s229
    %v240 = vmul.f32 %v239, %v231
    %v241 = vmul.f32 %v239, %v232
    %v242 = vmul.f32 %v239, %v233
    %v243 = vmul.f32 %v239, %v234
    %v244 = vmul.f32 %v239, %v235
    %v245 = vmul.f32 %v239, %v236
    %v246 = vmul.f32 %v239, %v237
    %v247 = vmul.f32 %v239, %v238
    %v248 = vld [vmem:[%s195 + $0x2] sm:$0xff]
    %v249 = vld [vmem:[%s195 + $0xa] sm:$0x3]
    %v250 = vld [vmem:[%s195 + $0x12] sm:$0xff]
    %v251 = vld [vmem:[%s195 + $0x1a] sm:$0x3]
    %v252 = vld [vmem:[%s195 + $0x22] sm:$0xff]
    %v253 = vld [vmem:[%s195 + $0x2a] sm:$0x3]
    %v254 = vld [vmem:[%s195 + $0x32] sm:$0xff]
    %v255 = vld [vmem:[%s195 + $0x3a] sm:$0x3]
    %v256 = vstv %s230
    %v257 = vmul.f32 %v256, %v248
    %v258 = vmul.f32 %v256, %v249
    %v259 = vmul.f32 %v256, %v250
    %v260 = vmul.f32 %v256, %v251
    %v261 = vmul.f32 %v256, %v252
    %v262 = vmul.f32 %v256, %v253
    %v263 = vmul.f32 %v256, %v254
    %v264 = vmul.f32 %v256, %v255
    %v265 = vadd.f32 %v240, %v257
    %v266 = vadd.f32 %v241, %v258
    %v267 = vadd.f32 %v242, %v259
    %v268 = vadd.f32 %v243, %v260
    %v269 = vadd.f32 %v244, %v261
    %v270 = vadd.f32 %v245, %v262
    %v271 = vadd.f32 %v246, %v263
    %v272 = vadd.f32 %v247, %v264
    %v273 = vadd.f32 %v221, %v265
    %v274 = vadd.f32 %v222, %v266
    %v275 = vadd.f32 %v223, %v267
    %v276 = vadd.f32 %v224, %v268
    %v277 = vadd.f32 %v225, %v269
    %v278 = vadd.f32 %v226, %v270
    %v279 = vadd.f32 %v227, %v271
    %v280 = vadd.f32 %v228, %v272
    %s281 = sld [smem:[#allocation2 + $0x5]]
    %s282 = sld [smem:[#allocation2 + $0xe]]
    %v283 = vld [vmem:[%s177 + $0x4] sm:$0xff]
    %v284 = vld [vmem:[%s177 + $0xc] sm:$0x3]
    %v285 = vld [vmem:[%s177 + $0x14] sm:$0xff]
    %v286 = vld [vmem:[%s177 + $0x1c] sm:$0x3]
    %v287 = vld [vmem:[%s177 + $0x24] sm:$0xff]
    %v288 = vld [vmem:[%s177 + $0x2c] sm:$0x3]
    %v289 = vld [vmem:[%s177 + $0x34] sm:$0xff]
    %v290 = vld [vmem:[%s177 + $0x3c] sm:$0x3]
    %v291 = vstv %s281
    %v292 = vmul.f32 %v291, %v283
    %v293 = vmul.f32 %v291, %v284
    %v294 = vmul.f32 %v291, %v285
    %v295 = vmul.f32 %v291, %v286
    %v296 = vmul.f32 %v291, %v287
    %v297 = vmul.f32 %v291, %v288
    %v298 = vmul.f32 %v291, %v289
    %v299 = vmul.f32 %v291, %v290
    %v300 = vld [vmem:[%s195 + $0x4] sm:$0xff]
    %v301 = vld [vmem:[%s195 + $0xc] sm:$0x3]
    %v302 = vld [vmem:[%s195 + $0x14] sm:$0xff]
    %v303 = vld [vmem:[%s195 + $0x1c] sm:$0x3]
    %v304 = vld [vmem:[%s195 + $0x24] sm:$0xff]
    %v305 = vld [vmem:[%s195 + $0x2c] sm:$0x3]
    %v306 = vld [vmem:[%s195 + $0x34] sm:$0xff]
    %v307 = vld [vmem:[%s195 + $0x3c] sm:$0x3]
    %v308 = vstv %s282
    %v309 = vmul.f32 %v308, %v300
    %v310 = vmul.f32 %v308, %v301
    %v311 = vmul.f32 %v308, %v302
    %v312 = vmul.f32 %v308, %v303
    %v313 = vmul.f32 %v308, %v304
    %v314 = vmul.f32 %v308, %v305
    %v315 = vmul.f32 %v308, %v306
    %v316 = vmul.f32 %v308, %v307
    %v317 = vadd.f32 %v292, %v309
    %v318 = vadd.f32 %v293, %v310
    %v319 = vadd.f32 %v294, %v311
    %v320 = vadd.f32 %v295, %v312
    %v321 = vadd.f32 %v296, %v313
    %v322 = vadd.f32 %v297, %v314
    %v323 = vadd.f32 %v298, %v315
    %v324 = vadd.f32 %v299, %v316
    %v325 = vadd.f32 %v273, %v317
    %v326 = vadd.f32 %v274, %v318
    %v327 = vadd.f32 %v275, %v319
    %v328 = vadd.f32 %v276, %v320
    %v329 = vadd.f32 %v277, %v321
    %v330 = vadd.f32 %v278, %v322
    %v331 = vadd.f32 %v279, %v323
    %v332 = vadd.f32 %v280, %v324
    %s333 = sld [smem:[#allocation2 + $0x6]]
    %s334 = sld [smem:[#allocation2 + $0xf]]
    %s335 = scalar_lea.vmem %s1, 64
    %v336 = vld [vmem:[%s335] sm:$0xff]
    %v337 = vld [vmem:[%s335 + $0x8] sm:$0x3]
    %v338 = vld [vmem:[%s335 + $0x10] sm:$0xff]
    %v339 = vld [vmem:[%s335 + $0x18] sm:$0x3]
    %v340 = vld [vmem:[%s335 + $0x20] sm:$0xff]
    %v341 = vld [vmem:[%s335 + $0x28] sm:$0x3]
    %v342 = vld [vmem:[%s335 + $0x30] sm:$0xff]
    %v343 = vld [vmem:[%s335 + $0x38] sm:$0x3]
    %v344 = vstv %s333
    %v345 = vmul.f32 %v344, %v336
    %v346 = vmul.f32 %v344, %v337
    %v347 = vmul.f32 %v344, %v338
    %v348 = vmul.f32 %v344, %v339
    %v349 = vmul.f32 %v344, %v340
    %v350 = vmul.f32 %v344, %v341
    %v351 = vmul.f32 %v344, %v342
    %v352 = vmul.f32 %v344, %v343
    %s353 = scalar_lea.vmem %s2, 64
    %v354 = vld [vmem:[%s353] sm:$0xff]
    %v355 = vld [vmem:[%s353 + $0x8] sm:$0x3]
    %v356 = vld [vmem:[%s353 + $0x10] sm:$0xff]
    %v357 = vld [vmem:[%s353 + $0x18] sm:$0x3]
    %v358 = vld [vmem:[%s353 + $0x20] sm:$0xff]
    %v359 = vld [vmem:[%s353 + $0x28] sm:$0x3]
    %v360 = vld [vmem:[%s353 + $0x30] sm:$0xff]
    %v361 = vld [vmem:[%s353 + $0x38] sm:$0x3]
    %v362 = vstv %s334
    %v363 = vmul.f32 %v362, %v354
    %v364 = vmul.f32 %v362, %v355
    %v365 = vmul.f32 %v362, %v356
    %v366 = vmul.f32 %v362, %v357
    %v367 = vmul.f32 %v362, %v358
    %v368 = vmul.f32 %v362, %v359
    %v369 = vmul.f32 %v362, %v360
    %v370 = vmul.f32 %v362, %v361
    %v371 = vadd.f32 %v345, %v363
    %v372 = vadd.f32 %v346, %v364
    %v373 = vadd.f32 %v347, %v365
    %v374 = vadd.f32 %v348, %v366
    %v375 = vadd.f32 %v349, %v367
    %v376 = vadd.f32 %v350, %v368
    %v377 = vadd.f32 %v351, %v369
    %v378 = vadd.f32 %v352, %v370
    %v379 = vadd.f32 %v325, %v371
    %v380 = vadd.f32 %v326, %v372
    %v381 = vadd.f32 %v327, %v373
    %v382 = vadd.f32 %v328, %v374
    %v383 = vadd.f32 %v329, %v375
    %v384 = vadd.f32 %v330, %v376
    %v385 = vadd.f32 %v331, %v377
    %v386 = vadd.f32 %v332, %v378
    %s387 = sld [smem:[#allocation2 + $0x7]]
    %s388 = sld [smem:[#allocation2 + $0x10]]
    %v389 = vld [vmem:[%s335 + $0x2] sm:$0xff]
    %v390 = vld [vmem:[%s335 + $0xa] sm:$0x3]
    %v391 = vld [vmem:[%s335 + $0x12] sm:$0xff]
    %v392 = vld [vmem:[%s335 + $0x1a] sm:$0x3]
    %v393 = vld [vmem:[%s335 + $0x22] sm:$0xff]
    %v394 = vld [vmem:[%s335 + $0x2a] sm:$0x3]
    %v395 = vld [vmem:[%s335 + $0x32] sm:$0xff]
    %v396 = vld [vmem:[%s335 + $0x3a] sm:$0x3]
    %v397 = vstv %s387
    %v398 = vmul.f32 %v397, %v389
    %v399 = vmul.f32 %v397, %v390
    %v400 = vmul.f32 %v397, %v391
    %v401 = vmul.f32 %v397, %v392
    %v402 = vmul.f32 %v397, %v393
    %v403 = vmul.f32 %v397, %v394
    %v404 = vmul.f32 %v397, %v395
    %v405 = vmul.f32 %v397, %v396
    %v406 = vld [vmem:[%s353 + $0x2] sm:$0xff]
    %v407 = vld [vmem:[%s353 + $0xa] sm:$0x3]
    %v408 = vld [vmem:[%s353 + $0x12] sm:$0xff]
    %v409 = vld [vmem:[%s353 + $0x1a] sm:$0x3]
    %v410 = vld [vmem:[%s353 + $0x22] sm:$0xff]
    %v411 = vld [vmem:[%s353 + $0x2a] sm:$0x3]
    %v412 = vld [vmem:[%s353 + $0x32] sm:$0xff]
    %v413 = vld [vmem:[%s353 + $0x3a] sm:$0x3]
    %v414 = vstv %s388
    %v415 = vmul.f32 %v414, %v406
    %v416 = vmul.f32 %v414, %v407
    %v417 = vmul.f32 %v414, %v408
    %v418 = vmul.f32 %v414, %v409
    %v419 = vmul.f32 %v414, %v410
    %v420 = vmul.f32 %v414, %v411
    %v421 = vmul.f32 %v414, %v412
    %v422 = vmul.f32 %v414, %v413
    %v423 = vadd.f32 %v398, %v415
    %v424 = vadd.f32 %v399, %v416
    %v425 = vadd.f32 %v400, %v417
    %v426 = vadd.f32 %v401, %v418
    %v427 = vadd.f32 %v402, %v419
    %v428 = vadd.f32 %v403, %v420
    %v429 = vadd.f32 %v404, %v421
    %v430 = vadd.f32 %v405, %v422
    %v431 = vadd.f32 %v379, %v423
    %v432 = vadd.f32 %v380, %v424
    %v433 = vadd.f32 %v381, %v425
    %v434 = vadd.f32 %v382, %v426
    %v435 = vadd.f32 %v383, %v427
    %v436 = vadd.f32 %v384, %v428
    %v437 = vadd.f32 %v385, %v429
    %v438 = vadd.f32 %v386, %v430
    %s439 = sld [smem:[#allocation2 + $0x8]]
    %s440 = sld [smem:[#allocation2 + $0x11]]
    %v441 = vld [vmem:[%s335 + $0x4] sm:$0xff]
    %v442 = vld [vmem:[%s335 + $0xc] sm:$0x3]
    %v443 = vld [vmem:[%s335 + $0x14] sm:$0xff]
    %v444 = vld [vmem:[%s335 + $0x1c] sm:$0x3]
    %v445 = vld [vmem:[%s335 + $0x24] sm:$0xff]
    %v446 = vld [vmem:[%s335 + $0x2c] sm:$0x3]
    %v447 = vld [vmem:[%s335 + $0x34] sm:$0xff]
    %v448 = vld [vmem:[%s335 + $0x3c] sm:$0x3]
    %v449 = vstv %s439
    %v450 = vmul.f32 %v449, %v441
    %v451 = vmul.f32 %v449, %v442
    %v452 = vmul.f32 %v449, %v443
    %v453 = vmul.f32 %v449, %v444
    %v454 = vmul.f32 %v449, %v445
    %v455 = vmul.f32 %v449, %v446
    %v456 = vmul.f32 %v449, %v447
    %v457 = vmul.f32 %v449, %v448
    %v458 = vld [vmem:[%s353 + $0x4] sm:$0xff]
    %v459 = vld [vmem:[%s353 + $0xc] sm:$0x3]
    %v460 = vld [vmem:[%s353 + $0x14] sm:$0xff]
    %v461 = vld [vmem:[%s353 + $0x1c] sm:$0x3]
    %v462 = vld [vmem:[%s353 + $0x24] sm:$0xff]
    %v463 = vld [vmem:[%s353 + $0x2c] sm:$0x3]
    %v464 = vld [vmem:[%s353 + $0x34] sm:$0xff]
    %v465 = vld [vmem:[%s353 + $0x3c] sm:$0x3]
    %v466 = vstv %s440
    %v467 = vmul.f32 %v466, %v458
    %v468 = vmul.f32 %v466, %v459
    %v469 = vmul.f32 %v466, %v460
    %v470 = vmul.f32 %v466, %v461
    %v471 = vmul.f32 %v466, %v462
    %v472 = vmul.f32 %v466, %v463
    %v473 = vmul.f32 %v466, %v464
    %v474 = vmul.f32 %v466, %v465
    %v475 = vadd.f32 %v450, %v467
    %v476 = vadd.f32 %v451, %v468
    %v477 = vadd.f32 %v452, %v469
    %v478 = vadd.f32 %v453, %v470
    %v479 = vadd.f32 %v454, %v471
    %v480 = vadd.f32 %v455, %v472
    %v481 = vadd.f32 %v456, %v473
    %v482 = vadd.f32 %v457, %v474
    %v483 = vadd.f32 %v431, %v475
    %v484 = vadd.f32 %v432, %v476
    %v485 = vadd.f32 %v433, %v477
    %v486 = vadd.f32 %v434, %v478
    %v487 = vadd.f32 %v435, %v479
    %v488 = vadd.f32 %v436, %v480
    %v489 = vadd.f32 %v437, %v481
    %v490 = vadd.f32 %v438, %v482
    %vm491 = vcmask 64512
    %492 = vst.msk [vmem:[%s3] sm:$0xff] %vm491, %v483
    %vm493 = vcmask 58368
    %494 = vst.msk [vmem:[%s3 + $0x8] sm:$0x3] %vm493, %v484
    %495 = vst.msk [vmem:[%s3 + $0x10] sm:$0xff] %vm491, %v485
    %496 = vst.msk [vmem:[%s3 + $0x18] sm:$0x3] %vm493, %v486
    %497 = vst.msk [vmem:[%s3 + $0x20] sm:$0xff] %vm491, %v487
    %498 = vst.msk [vmem:[%s3 + $0x28] sm:$0x3] %vm493, %v488
    %499 = vst.msk [vmem:[%s3 + $0x30] sm:$0xff] %vm491, %v489
    %500 = vst.msk [vmem:[%s3 + $0x38] sm:$0x3] %vm493, %v490
    // Predicated region
    $region18: #{tpu_custom_call.1} parent=1 // pred_check
      _
    $region19: #{tpu_custom_call.1} parent=1 // pred_check_branch
      %502 = sbr.rel (0) target = $region21
    $region20: #{tpu_custom_call.1} parent=1 // pred_region
      _
    $region21: #{tpu_custom_call.1} parent=1 // pred_fallthru
      _
    // Predicated region
    $region22: #{tpu_custom_call.1} parent=1 // pred_check
      _
    $region23: #{tpu_custom_call.1} parent=1 // pred_check_branch
      %504 = sbr.rel (0) target = $region25
    $region24: #{tpu_custom_call.1} parent=1 // pred_region
      _
    $region25: #{tpu_custom_call.1} parent=1 // pred_fallthru
      _
    %505 = vsyncpa [#allocation3], 1

</llo_original>
